<compile_context>
chip_gen: v5e
topology: v5e:2x2
jax: 0.10.0
libtpu: 0.0.40
codegen_flags: <defaults>
</compile_context>

<pallas_src>
import numpy as np
import jax
import jax.numpy as jnp
from jax import lax
from jax.experimental import pallas as pl
from jax.experimental.pallas import tpu as pltpu

QDIM = 4
HIDDEN_SIZES = (32, 32)   # LNMLP hidden layers = HIDDEN_SIZES[:-1], embed dim = HIDDEN_SIZES[-1]
BIAS = 10.0
LN_EPS = 1e-5             # torch.nn.LayerNorm default eps
_HP = lax.Precision.HIGHEST


def _cholesky_mm_kernel(x_ref, w1a_ref, lnw_ref, lnb_ref, g_ref, c_ref, m_ref):
    n = QDIM * QDIM

    # Linear(qdim->H) with the LayerNorm mean and b1 folded in: x carries a trailing
    # ones row and W1a's columns are mean-centered, so hc is exactly the mean-centered
    # pre-LN activation.
    hc = jnp.dot(w1a_ref[...], x_ref[...],
                 preferred_element_type=jnp.float32, precision=_HP)      # (H, Bt)
    var = jnp.mean(hc * hc, axis=0, keepdims=True)                       # (1, Bt) biased var
    h = jnp.tanh(hc * lax.rsqrt(var + LN_EPS) * lnw_ref[...] + lnb_ref[...])

    # One fused matmul produces, for every output entry m = i*QDIM + j:
    #   rows [k*n, (k+1)*n)        A_k = <G[i*QDIM+k, :], h>   (bias-free L[i,k] part)
    #   rows [(QDIM+k)*n, ...)     B_k = <G[j*QDIM+k, :], h>   (bias-free L[j,k] part)
    #   rows [2*QDIM*n, ...)       D   = folded bias cross-terms
    sel = jnp.dot(g_ref[...], h,
                  preferred_element_type=jnp.float32, precision=_HP)     # ((2q+1)*n, Bt)

    acc = sel[2 * QDIM * n:, :] + c_ref[...]                             # cross + constant
    for k in range(QDIM):
        acc = acc + sel[k * n:(k + 1) * n, :] * sel[(QDIM + k) * n:(QDIM + k + 1) * n, :]
    m_ref[...] = acc                                                     # (n, Bt)


def init_params(key, qdim=QDIM, hidden_sizes=HIDDEN_SIZES):
    """Weights stored (in_features, out_features) (= transpose of torch Linear)."""
    h1, e = hidden_sizes[0], hidden_sizes[-1]
    t = qdim * (qdim + 1) // 2
    ks = jax.random.split(key, 6)

    def lin_w(k, fi, fo):
        bound = 1.0 / np.sqrt(fi)
        return jax.random.uniform(k, (fi, fo), jnp.float32, -bound, bound)

    def lin_b(k, fi, fo):
        bound = 1.0 / np.sqrt(fi)
        return jax.random.uniform(k, (1, fo), jnp.float32, -bound, bound)

    return dict(
        w1=lin_w(ks[0], qdim, h1), b1=lin_b(ks[1], qdim, h1),
        lnw=jnp.ones((1, h1), jnp.float32), lnb=jnp.zeros((1, h1), jnp.float32),
        w2=lin_w(ks[2], h1, e), b2=lin_b(ks[3], h1, e),
        wo=lin_w(ks[4], e, t), bo=lin_b(ks[5], e, t),
    )


def _scatter_consts(qdim):
    """Scatter matrix L_params -> row-major flat L, and the +bias shift on the diag."""
    t = qdim * (qdim + 1) // 2
    n = qdim * qdim
    s = np.zeros((t, n), np.float32)
    for i in range(qdim):                         # first qdim params -> diagonal (i, i)
        s[i, i * qdim + i] = 1.0
    ii, jj = np.tril_indices(qdim, k=-1)          # remaining -> strict lower triangle
    for r in range(len(ii)):
        s[qdim + r, ii[r] * qdim + jj[r]] = 1.0
    shift = np.zeros((t,), np.float32)
    shift[:qdim] = BIAS
    return jnp.asarray(s), jnp.asarray(shift)


def _round_up(x, m):
    return (x + m - 1) // m * m


def _choose_b_tile(batch, requested):
    requested = max(128, min(int(requested), 8192))
    cols = _round_up(batch, 128)
    if cols <= 128:
        return 128
    # Keep >= 2 grid steps (v7x megacore sharding of the "parallel" axis) and cap
    # dead-column padding waste at ~10% of the real batch.
    cap = min(_round_up(requested, 128), _round_up((cols + 1) // 2, 128))
    best = 128
    for tile in range(128, cap + 1, 128):
        waste = _round_up(batch, tile) - batch
        if waste <= max(int(0.10 * batch), 127):
            best = tile
    return best


def _fold_constants(params, qdim):
    """All weight-dependent folding, done offline with f32-accurate matmuls."""
    n = qdim * qdim
    h_dim = params['w1'].shape[1]
    s_mat, shift = _scatter_consts(qdim)

    # --- LayerNorm-mean fold + bias fold into the first Linear ---
    w1t = params['w1'].T                                        # (H, qdim)
    b1 = params['b1'].reshape(-1)                               # (H,)
    w1c = w1t - jnp.mean(w1t, axis=0, keepdims=True)
    b1c = (b1 - jnp.mean(b1)).reshape(h_dim, 1)
    w1a = jnp.concatenate([w1c, b1c], axis=1)                   # (H, qdim+1), pairs with ones-row
    lnw = params['lnw'].reshape(h_dim, 1)
    lnb = params['lnb'].reshape(h_dim, 1)

    # --- Fold Linear(H->E) + Linear(E->t) + scatter + diag bias: Lflat = G @ h + c ---
    wl = jnp.dot(params['wo'], s_mat, precision=_HP)                       # (E, n)
    bl = jnp.dot(params['bo'].reshape(-1) + shift, s_mat, precision=_HP)   # (n,)
    g_l = jnp.dot(wl.T, params['w2'].T, precision=_HP)                     # (n, H)
    c_l = jnp.dot(wl.T, params['b2'].reshape(-1), precision=_HP) + bl      # (n,)

    # --- Fold the L @ L^T quadratic form: M = sum_k (A_k h)(B_k h) + D h + const ---
    idx_i = np.repeat(np.arange(qdim), qdim)          # i for flat m = i*qdim + j
    idx_j = np.tile(np.arange(qdim), qdim)            # j
    ks = np.arange(qdim)
    a_rows = (idx_i[None, :] * qdim + ks[:, None]).reshape(-1)   # block k contiguous
    b_rows = (idx_j[None, :] * qdim + ks[:, None]).reshape(-1)
    a_sel, b_sel = g_l[a_rows], g_l[b_rows]                      # (qdim*n, H) each
    a_c, b_c = c_l[a_rows], c_l[b_rows]                          # (qdim*n,)
    d_blk = (a_sel * b_c[:, None] + b_sel * a_c[:, None]).reshape(qdim, n, h_dim).sum(0)
    const = (a_c * b_c).reshape(qdim, n).sum(0).reshape(n, 1)
    gfull = jnp.concatenate([a_sel, b_sel, d_blk], axis=0)       # ((2q+1)*n, H) = (144, 32)
    # NOTE: the B-half of gfull is a fixed sublane permutation of the A-half and many of
    # its rows are zero; shrinking it would trade MXU/store work into XLU permutes.  The
    # MXU has slack here, so it is intentionally left dense (simple, lane-dense tail).
    return (w1a, lnw, lnb, gfull, const)


def cholesky_mm_net(q, params, *, b_tile=4096, lane_major_output=False):
    B, qdim = q.shape
    assert qdim == QDIM and qdim > 1
    n = qdim * qdim
    h_dim = params['w1'].shape[1]

    consts = _fold_constants(params, qdim)

    b_tile = _choose_b_tile(B, b_tile)
    b_pad = _round_up(B, b_tile)

    # Batch-on-lanes input with a trailing ones row (folds b1 into the first matmul).
    q_t = q.T.astype(jnp.float32)                                # (qdim, B)
    if b_pad > B:
        q_t = jnp.pad(q_t, ((0, 0), (0, b_pad - B)))
    q_aug = jnp.concatenate([q_t, jnp.ones((1, b_pad), jnp.float32)], axis=0)

    const_specs = [pl.BlockSpec(c.shape, lambda i: (0, 0)) for c in consts]
    grid = (b_pad // b_tile,)

    rows_big = (2 * qdim + 1) * n
    flops_per_col = (2 * h_dim * (qdim + 1) + 2 * rows_big * h_dim
                     + 6 * h_dim + (2 * qdim + 2) * n)
    cost = pl.CostEstimate(
        flops=int(flops_per_col * b_pad),
        transcendentals=int((h_dim + 1) * b_pad),
        bytes_accessed=int(4 * ((qdim + 1) + n) * b_pad
                           + 4 * sum(int(np.prod(c.shape)) for c in consts)),
    )

    compiler_params = pltpu.CompilerParams(
        dimension_semantics=("parallel",),
        vmem_limit_bytes=(32 << 20) if b_tile > 4096 else None,
    )

    m_t = pl.pallas_call(
        _cholesky_mm_kernel,
        out_shape=jax.ShapeDtypeStruct((n, b_pad), jnp.float32),
        grid=grid,
        in_specs=[pl.BlockSpec((qdim + 1, b_tile), lambda i: (0, i))] + const_specs,
        out_specs=pl.BlockSpec((n, b_tile), lambda i: (0, i)),
        compiler_params=compiler_params,
        cost_estimate=cost,
    )(q_aug, *consts)

    if lane_major_output:
        # TODO(synk): downstream consumers can take this (qdim*qdim, B) lane-major layout
        # directly and fuse the transpose, avoiding a full HBM round-trip of M.
        return m_t[:, :B]
    return m_t[:, :B].T.reshape(B, qdim, qdim)


def _reference(q, params):
    """Pure-JAX reference mirroring the PyTorch forward (f32-accurate matmuls)."""
    h = jnp.dot(q, params['w1'], precision=_HP) + params['b1']
    mu = h.mean(-1, keepdims=True)
    var = ((h - mu) ** 2).mean(-1, keepdims=True)
    h = (h - mu) / jnp.sqrt(var + LN_EPS) * params['lnw'] + params['lnb']
    h = jnp.tanh(h)
    e = jnp.dot(h, params['w2'], precision=_HP) + params['b2']
    p = jnp.dot(e, params['wo'], precision=_HP) + params['bo']
    l_diag = p[:, :QDIM] + BIAS                   # pos_enforce = identity, then += bias
    l_tril = p[:, QDIM:]
    b = q.shape[0]
    ii, jj = np.tril_indices(QDIM, k=-1)
    di = np.arange(QDIM)
    L = jnp.zeros((b, QDIM, QDIM), jnp.float32)
    L = L.at[:, ii, jj].set(l_tril)
    L = L.at[:, di, di].set(l_diag)
    return jnp.einsum('bik,bjk->bij', L, L, precision=_HP)


if __name__ == "__main__":
    key = jax.random.PRNGKey(0)
    kq, kp = jax.random.split(key)
    B = 8
    q = jax.random.normal(kq, (B, QDIM), dtype=jnp.float32)
    params = init_params(kp)

    m = jax.block_until_ready(cholesky_mm_net(q, params))
    m_ref = jax.block_until_ready(_reference(q, params))
    np.testing.assert_allclose(np.asarray(m), np.asarray(m_ref), rtol=1e-4, atol=1e-4)
    print("KERNEL_OK")
</pallas_src>

<mosaic_0001>
module attributes {stable_mosaic.version = 11 : i64} {
  func.func @_cholesky_mm_kernel(%arg0: i32, %arg1: memref<5x128xf32, #tpu.memory_space<vmem>>, %arg2: memref<32x5xf32, #tpu.memory_space<vmem>>, %arg3: memref<32x1xf32, #tpu.memory_space<vmem>>, %arg4: memref<32x1xf32, #tpu.memory_space<vmem>>, %arg5: memref<144x32xf32, #tpu.memory_space<vmem>>, %arg6: memref<16x1xf32, #tpu.memory_space<vmem>>, %arg7: memref<16x128xf32, #tpu.memory_space<vmem>>) attributes {dimension_semantics = [#tpu.dimension_semantics<parallel>], iteration_bounds = array<i64: 1>, scalar_prefetch = 0 : i64, scratch_operands = 0 : i64, tpu.core_type = #tpu.core_type<tc>, window_params = [{transform_indices = @transform_0, window_bounds = array<i64: 5, 128>}, {pipeline_mode = #tpu.pipeline_mode<synchronous>, transform_indices = @transform_1, window_bounds = array<i64: 32, 5>}, {pipeline_mode = #tpu.pipeline_mode<synchronous>, transform_indices = @transform_2, window_bounds = array<i64: 32, 1>}, {pipeline_mode = #tpu.pipeline_mode<synchronous>, transform_indices = @transform_3, window_bounds = array<i64: 32, 1>}, {pipeline_mode = #tpu.pipeline_mode<synchronous>, transform_indices = @transform_4, window_bounds = array<i64: 144, 32>}, {pipeline_mode = #tpu.pipeline_mode<synchronous>, transform_indices = @transform_5, window_bounds = array<i64: 16, 1>}, {transform_indices = @transform_6, window_bounds = array<i64: 16, 128>}]} {
    %c0 = arith.constant 0 : index
    %c0_0 = arith.constant 0 : index
    %0 = vector.load %arg2[%c0, %c0_0] : memref<32x5xf32, #tpu.memory_space<vmem>>, vector<32x5xf32>
    %c0_1 = arith.constant 0 : index
    %c0_2 = arith.constant 0 : index
    %1 = vector.load %arg1[%c0_1, %c0_2] : memref<5x128xf32, #tpu.memory_space<vmem>>, vector<5x128xf32>
    %cst = arith.constant dense<0.000000e+00> : vector<32x128xf32>
    %2 = tpu.matmul %0, %1, %cst {dimension_numbers = #tpu.dot_dimension_numbers<[1], [0], [0], [1], [0, 0, 1, 1], [], []>, precision = #tpu.contract_precision<fp32>} : vector<32x5xf32>, vector<5x128xf32>, vector<32x128xf32> -> vector<32x128xf32>
    %3 = arith.mulf %2, %2 : vector<32x128xf32>
    %cst_3 = arith.constant dense<0.000000e+00> : vector<128xf32>
    %4 = vector.multi_reduction <add>, %3, %cst_3 [0] : vector<32x128xf32> to vector<128xf32>
    %5 = vector.shape_cast %4 : vector<128xf32> to vector<1x128xf32>
    %cst_4 = arith.constant 3.200000e+01 : f32
    %6 = vector.broadcast %cst_4 : f32 to vector<1x128xf32>
    %7 = arith.divf %5, %6 : vector<1x128xf32>
    %cst_5 = arith.constant 9.99999974E-6 : f32
    %8 = vector.broadcast %cst_5 : f32 to vector<1x128xf32>
    %9 = arith.addf %7, %8 : vector<1x128xf32>
    %10 = math.rsqrt %9 : vector<1x128xf32>
    %11 = vector.broadcast %10 : vector<1x128xf32> to vector<32x128xf32>
    %12 = arith.mulf %2, %11 : vector<32x128xf32>
    %c0_6 = arith.constant 0 : index
    %c0_7 = arith.constant 0 : index
    %13 = vector.load %arg3[%c0_6, %c0_7] : memref<32x1xf32, #tpu.memory_space<vmem>>, vector<32x1xf32>
    %14 = vector.broadcast %13 : vector<32x1xf32> to vector<32x128xf32>
    %15 = arith.mulf %12, %14 : vector<32x128xf32>
    %c0_8 = arith.constant 0 : index
    %c0_9 = arith.constant 0 : index
    %16 = vector.load %arg4[%c0_8, %c0_9] : memref<32x1xf32, #tpu.memory_space<vmem>>, vector<32x1xf32>
    %17 = vector.broadcast %16 : vector<32x1xf32> to vector<32x128xf32>
    %18 = arith.addf %15, %17 : vector<32x128xf32>
    %19 = math.tanh %18 : vector<32x128xf32>
    %c0_10 = arith.constant 0 : index
    %c0_11 = arith.constant 0 : index
    %20 = vector.load %arg5[%c0_10, %c0_11] : memref<144x32xf32, #tpu.memory_space<vmem>>, vector<144x32xf32>
    %cst_12 = arith.constant dense<0.000000e+00> : vector<144x128xf32>
    %21 = tpu.matmul %20, %19, %cst_12 {dimension_numbers = #tpu.dot_dimension_numbers<[1], [0], [0], [1], [0, 0, 1, 1], [], []>, precision = #tpu.contract_precision<fp32>} : vector<144x32xf32>, vector<32x128xf32>, vector<144x128xf32> -> vector<144x128xf32>
    %22 = vector.extract_strided_slice %21 {offsets = [128, 0], sizes = [16, 128], strides = [1, 1]} : vector<144x128xf32> to vector<16x128xf32>
    %c0_13 = arith.constant 0 : index
    %c0_14 = arith.constant 0 : index
    %23 = vector.load %arg6[%c0_13, %c0_14] : memref<16x1xf32, #tpu.memory_space<vmem>>, vector<16x1xf32>
    %24 = vector.broadcast %23 : vector<16x1xf32> to vector<16x128xf32>
    %25 = arith.addf %22, %24 : vector<16x128xf32>
    %26 = vector.extract_strided_slice %21 {offsets = [0, 0], sizes = [16, 128], strides = [1, 1]} : vector<144x128xf32> to vector<16x128xf32>
    %27 = vector.extract_strided_slice %21 {offsets = [64, 0], sizes = [16, 128], strides = [1, 1]} : vector<144x128xf32> to vector<16x128xf32>
    %28 = arith.mulf %26, %27 : vector<16x128xf32>
    %29 = arith.addf %25, %28 : vector<16x128xf32>
    %30 = vector.extract_strided_slice %21 {offsets = [16, 0], sizes = [16, 128], strides = [1, 1]} : vector<144x128xf32> to vector<16x128xf32>
    %31 = vector.extract_strided_slice %21 {offsets = [80, 0], sizes = [16, 128], strides = [1, 1]} : vector<144x128xf32> to vector<16x128xf32>
    %32 = arith.mulf %30, %31 : vector<16x128xf32>
    %33 = arith.addf %29, %32 : vector<16x128xf32>
    %34 = vector.extract_strided_slice %21 {offsets = [32, 0], sizes = [16, 128], strides = [1, 1]} : vector<144x128xf32> to vector<16x128xf32>
    %35 = vector.extract_strided_slice %21 {offsets = [96, 0], sizes = [16, 128], strides = [1, 1]} : vector<144x128xf32> to vector<16x128xf32>
    %36 = arith.mulf %34, %35 : vector<16x128xf32>
    %37 = arith.addf %33, %36 : vector<16x128xf32>
    %38 = vector.extract_strided_slice %21 {offsets = [48, 0], sizes = [16, 128], strides = [1, 1]} : vector<144x128xf32> to vector<16x128xf32>
    %39 = vector.extract_strided_slice %21 {offsets = [112, 0], sizes = [16, 128], strides = [1, 1]} : vector<144x128xf32> to vector<16x128xf32>
    %40 = arith.mulf %38, %39 : vector<16x128xf32>
    %41 = arith.addf %37, %40 : vector<16x128xf32>
    %c0_15 = arith.constant 0 : index
    %c0_16 = arith.constant 0 : index
    %42 = vector.load %arg7[%c0_15, %c0_16] : memref<16x128xf32, #tpu.memory_space<vmem>>, vector<16x128xf32>
    tpu.vector_store %arg7[%c0_15, %c0_16], %41 {strides = array<i32>} : memref<16x128xf32, #tpu.memory_space<vmem>>, vector<16x128xf32>,
    return
  }
  func.func @transform_0(%arg0: i32) -> (i32, i32) {
    %c0_i32 = arith.constant 0 : i32
    %c0_i32_0 = arith.constant 0 : i32
    return %c0_i32, %arg0 : i32, i32
  }
  func.func @transform_1(%arg0: i32) -> (i32, i32) {
    %c0_i32 = arith.constant 0 : i32
    %c0_i32_0 = arith.constant 0 : i32
    %c0_i32_1 = arith.constant 0 : i32
    return %c0_i32, %c0_i32_0 : i32, i32
  }
  func.func @transform_2(%arg0: i32) -> (i32, i32) {
    %c0_i32 = arith.constant 0 : i32
    %c0_i32_0 = arith.constant 0 : i32
    %c0_i32_1 = arith.constant 0 : i32
    return %c0_i32, %c0_i32_0 : i32, i32
  }
  func.func @transform_3(%arg0: i32) -> (i32, i32) {
    %c0_i32 = arith.constant 0 : i32
    %c0_i32_0 = arith.constant 0 : i32
    %c0_i32_1 = arith.constant 0 : i32
    return %c0_i32, %c0_i32_0 : i32, i32
  }
  func.func @transform_4(%arg0: i32) -> (i32, i32) {
    %c0_i32 = arith.constant 0 : i32
    %c0_i32_0 = arith.constant 0 : i32
    %c0_i32_1 = arith.constant 0 : i32
    return %c0_i32, %c0_i32_0 : i32, i32
  }
  func.func @transform_5(%arg0: i32) -> (i32, i32) {
    %c0_i32 = arith.constant 0 : i32
    %c0_i32_0 = arith.constant 0 : i32
    %c0_i32_1 = arith.constant 0 : i32
    return %c0_i32, %c0_i32_0 : i32, i32
  }
  func.func @transform_6(%arg0: i32) -> (i32, i32) {
    %c0_i32 = arith.constant 0 : i32
    %c0_i32_0 = arith.constant 0 : i32
    return %c0_i32, %arg0 : i32, i32
  }
}

</mosaic_0001>

<llo_original>
// kernel: tpu_custom_call.1
$region0: #{tpu_custom_call.1}
  #allocation0 [shape = 'u32[]', space=smem, size = 0x4, offset = 0x4, fixed_abs, tag = 'smem constant byte address 0x4 - core index']
  #allocation1 [shape = 'u32[72,128]{1,0:T(1,128)}', space=vmem, size = 0x9000, scoped, tag = 'internal scratch']
  %s0 = inlined_call_operand.vmem [shape: f32[5,128], index: 0, kind: input, shape index: {}]
  %s1 = inlined_call_operand.vmem [shape: f32[32,5], index: 1, kind: input, shape index: {}]
  %s2 = inlined_call_operand.vmem [shape: f32[32,1], index: 2, kind: input, shape index: {}]
  %s3 = inlined_call_operand.vmem [shape: f32[32,1], index: 3, kind: input, shape index: {}]
  %s4 = inlined_call_operand.vmem [shape: f32[144,32], index: 4, kind: input, shape index: {}]
  %s5 = inlined_call_operand.vmem [shape: f32[16,1], index: 5, kind: input, shape index: {}]
  %s6 = inlined_call_operand.hbm [shape: f32[16,128], index: 6, kind: output, shape index: {}]
  %s7 = sld [smem:[#allocation0]]
  $region34: #{tpu_custom_call.1} parent=0
    _
  %s9 = ssub.s32 1, %s7
  %s10 = scalar_select 0, %s9, %s7
  $region1: #{tpu_custom_call.1} parent=0
    #allocation2 [shape = 'u8[8192]{0}', space=vmem, size = 0x2000, scoped, tag = 'output window, operand 0, single buffered']
    #allocation3 [shape = 's32[1]{0}', space=sflag, size = 0x4, scoped, tag = 'scoped memory for tpu_custom_call.1']
    %11 = vsyncpa [#allocation3], 0
    // Predicated region
    $region2: #{tpu_custom_call.1} parent=1 // pred_check
      _
    $region3: #{tpu_custom_call.1} parent=1 // pred_check_branch
      %13 = sbr.rel (0) target = $region5
    $region4: #{tpu_custom_call.1} parent=1 // pred_region
      _
    $region5: #{tpu_custom_call.1} parent=1 // pred_fallthru
      _
    // Predicated region
    $region6: #{tpu_custom_call.1} parent=1 // pred_check
      _
    $region7: #{tpu_custom_call.1} parent=1 // pred_check_branch
      %15 = sbr.rel (0) target = $region9
    $region8: #{tpu_custom_call.1} parent=1 // pred_region
      _
    $region9: #{tpu_custom_call.1} parent=1 // pred_fallthru
      _
    // Predicated region
    $region10: #{tpu_custom_call.1} parent=1 // pred_check
      _
    $region11: #{tpu_custom_call.1} parent=1 // pred_check_branch
      %17 = sbr.rel (0) target = $region13
    $region12: #{tpu_custom_call.1} parent=1 // pred_region
      _
    $region13: #{tpu_custom_call.1} parent=1 // pred_fallthru
      _
    // Predicated region
    $region14: #{tpu_custom_call.1} parent=1 // pred_check
      _
    $region15: #{tpu_custom_call.1} parent=1 // pred_check_branch
      %19 = sbr.rel (0) target = $region17
    $region16: #{tpu_custom_call.1} parent=1 // pred_region
      _
    $region17: #{tpu_custom_call.1} parent=1 // pred_fallthru
      _
    // Predicated region
    $region18: #{tpu_custom_call.1} parent=1 // pred_check
      _
    $region19: #{tpu_custom_call.1} parent=1 // pred_check_branch
      %21 = sbr.rel (0) target = $region21
    $region20: #{tpu_custom_call.1} parent=1 // pred_region
      _
    $region21: #{tpu_custom_call.1} parent=1 // pred_fallthru
      _
    // Predicated region
    $region22: #{tpu_custom_call.1} parent=1 // pred_check
      _
    $region23: #{tpu_custom_call.1} parent=1 // pred_check_branch
      %23 = sbr.rel (0) target = $region25
    $region24: #{tpu_custom_call.1} parent=1 // pred_region
      _
    $region25: #{tpu_custom_call.1} parent=1 // pred_fallthru
      _
    %v24 = vld [vmem:[%s1] sm:$0xff]
    %v25 = vld [vmem:[%s1 + $0x8] sm:$0xff]
    %v26 = vld [vmem:[%s1 + $0x10] sm:$0xff]
    %v27 = vld [vmem:[%s1 + $0x18] sm:$0xff]
    %v28 = vld [vmem:[%s0] sm:$0x1f]
    %vm29 = vcmask 39936
    %v31 = vsel %vm29, %v24, 0
    %v34 = vsel %vm29, %v25, 0
    %v37 = vsel %vm29, %v26, 0
    %v40 = vsel %vm29, %v27, 0
    %vm42 = vcmask 1044480
    %v44 = vsel %vm42, %v28, 0
    %46 = vmatpush.msra.mxu0 0.0
    %47 = vmatpush.msra.mxu0 0.0
    %48 = vmatpush.msra.mxu0 0.0
    %49 = vmatpush.msra.mxu0 0.0
    %50 = vmatpush.msra.mxu0 0.0
    %51 = vmatpush.msra.mxu0 0.0
    %52 = vmatpush.msra.mxu0 0.0
    %53 = vmatpush.msra.mxu0 0.0
    %54 = vmatpush.msra.mxu0 0.0
    %55 = vmatpush.msra.mxu0 0.0
    %56 = vmatpush.msra.mxu0 0.0
    %57 = vmatpush.msra.mxu0 0.0
    %58 = vmatpush.msra.mxu0 0.0
    %59 = vmatpush.msra.mxu0 0.0
    %60 = vmatpush.msra.mxu0 0.0
    %v61 = vand.u32 %v44, 4294901760
    %62 = vmatpush.msra.mxu0 %v61
    %v63 = vand.u32 %v31, 4294901760
    %v64 = vsub.f32 %v31, %v63
    %v65 = vand.u32 %v64, 4294901760
    %v66 = vsub.f32 %v64, %v65
    %v67 = vand.u32 %v66, 4294901760
    %68 = vmatmul.f32.gmra.mxu0 %v67
    %v69 = vpop.f32.mrf.mxu0
    %v70 = vadd.f32 0.0, %v69
    %v71 = vand.u32 %v34, 4294901760
    %v72 = vsub.f32 %v34, %v71
    %v73 = vand.u32 %v72, 4294901760
    %v74 = vsub.f32 %v72, %v73
    %v75 = vand.u32 %v74, 4294901760
    %76 = vmatmul.f32.gmra.mxu0 %v75
    %v77 = vpop.f32.mrf.mxu0
    %v78 = vadd.f32 0.0, %v77
    %v79 = vand.u32 %v37, 4294901760
    %v80 = vsub.f32 %v37, %v79
    %v81 = vand.u32 %v80, 4294901760
    %v82 = vsub.f32 %v80, %v81
    %v83 = vand.u32 %v82, 4294901760
    %84 = vmatmul.f32.gmra.mxu0 %v83
    %v85 = vpop.f32.mrf.mxu0
    %v86 = vadd.f32 0.0, %v85
    %v87 = vand.u32 %v40, 4294901760
    %v88 = vsub.f32 %v40, %v87
    %v89 = vand.u32 %v88, 4294901760
    %v90 = vsub.f32 %v88, %v89
    %v91 = vand.u32 %v90, 4294901760
    %92 = vmatmul.f32.gmra.mxu0 %v91
    %v93 = vpop.f32.mrf.mxu0
    %v94 = vadd.f32 0.0, %v93
    %95 = vdwg.mxu0
    %96 = vmatpush.msra.mxu0 0.0
    %97 = vmatpush.msra.mxu0 0.0
    %98 = vmatpush.msra.mxu0 0.0
    %99 = vmatpush.msra.mxu0 0.0
    %100 = vmatpush.msra.mxu0 0.0
    %101 = vmatpush.msra.mxu0 0.0
    %102 = vmatpush.msra.mxu0 0.0
    %103 = vmatpush.msra.mxu0 0.0
    %104 = vmatpush.msra.mxu0 0.0
    %105 = vmatpush.msra.mxu0 0.0
    %106 = vmatpush.msra.mxu0 0.0
    %107 = vmatpush.msra.mxu0 0.0
    %108 = vmatpush.msra.mxu0 0.0
    %109 = vmatpush.msra.mxu0 0.0
    %110 = vmatpush.msra.mxu0 0.0
    %v111 = vand.u32 %v44, 4294901760
    %v112 = vsub.f32 %v44, %v111
    %v113 = vand.u32 %v112, 4294901760
    %v114 = vsub.f32 %v112, %v113
    %v115 = vand.u32 %v114, 4294901760
    %116 = vmatpush.msra.mxu0 %v115
    %v117 = vand.u32 %v31, 4294901760
    %118 = vmatmul.f32.gmra.mxu0 %v117
    %v119 = vpop.f32.mrf.mxu0
    %v120 = vadd.f32 %v70, %v119
    %v121 = vand.u32 %v34, 4294901760
    %122 = vmatmul.f32.gmra.mxu0 %v121
    %v123 = vpop.f32.mrf.mxu0
    %v124 = vadd.f32 %v78, %v123
    %v125 = vand.u32 %v37, 4294901760
    %126 = vmatmul.f32.gmra.mxu0 %v125
    %v127 = vpop.f32.mrf.mxu0
    %v128 = vadd.f32 %v86, %v127
    %v129 = vand.u32 %v40, 4294901760
    %130 = vmatmul.f32.gmra.mxu0 %v129
    %v131 = vpop.f32.mrf.mxu0
    %v132 = vadd.f32 %v94, %v131
    %133 = vdwg.mxu0
    %134 = vmatpush.msra.mxu0 0.0
    %135 = vmatpush.msra.mxu0 0.0
    %136 = vmatpush.msra.mxu0 0.0
    %137 = vmatpush.msra.mxu0 0.0
    %138 = vmatpush.msra.mxu0 0.0
    %139 = vmatpush.msra.mxu0 0.0
    %140 = vmatpush.msra.mxu0 0.0
    %141 = vmatpush.msra.mxu0 0.0
    %142 = vmatpush.msra.mxu0 0.0
    %143 = vmatpush.msra.mxu0 0.0
    %144 = vmatpush.msra.mxu0 0.0
    %145 = vmatpush.msra.mxu0 0.0
    %146 = vmatpush.msra.mxu0 0.0
    %147 = vmatpush.msra.mxu0 0.0
    %148 = vmatpush.msra.mxu0 0.0
    %v149 = vand.u32 %v44, 4294901760
    %v150 = vsub.f32 %v44, %v149
    %151 = vmatpush.msra.mxu0 %v150
    %v152 = vand.u32 %v31, 4294901760
    %v153 = vsub.f32 %v31, %v152
    %154 = vmatmul.f32.gmra.mxu0 %v153
    %v155 = vpop.f32.mrf.mxu0
    %v156 = vadd.f32 %v120, %v155
    %v157 = vand.u32 %v34, 4294901760
    %v158 = vsub.f32 %v34, %v157
    %159 = vmatmul.f32.gmra.mxu0 %v158
    %v160 = vpop.f32.mrf.mxu0
    %v161 = vadd.f32 %v124, %v160
    %v162 = vand.u32 %v37, 4294901760
    %v163 = vsub.f32 %v37, %v162
    %164 = vmatmul.f32.gmra.mxu0 %v163
    %v165 = vpop.f32.mrf.mxu0
    %v166 = vadd.f32 %v128, %v165
    %v167 = vand.u32 %v40, 4294901760
    %v168 = vsub.f32 %v40, %v167
    %169 = vmatmul.f32.gmra.mxu0 %v168
    %v170 = vpop.f32.mrf.mxu0
    %v171 = vadd.f32 %v132, %v170
    %172 = vdwg.mxu0
    %173 = vmatpush.msra.mxu0 0.0
    %174 = vmatpush.msra.mxu0 0.0
    %175 = vmatpush.msra.mxu0 0.0
    %176 = vmatpush.msra.mxu0 0.0
    %177 = vmatpush.msra.mxu0 0.0
    %178 = vmatpush.msra.mxu0 0.0
    %179 = vmatpush.msra.mxu0 0.0
    %180 = vmatpush.msra.mxu0 0.0
    %181 = vmatpush.msra.mxu0 0.0
    %182 = vmatpush.msra.mxu0 0.0
    %183 = vmatpush.msra.mxu0 0.0
    %184 = vmatpush.msra.mxu0 0.0
    %185 = vmatpush.msra.mxu0 0.0
    %186 = vmatpush.msra.mxu0 0.0
    %187 = vmatpush.msra.mxu0 0.0
    %v188 = vand.u32 %v44, 4294901760
    %189 = vmatpush.msra.mxu0 %v188
    %v190 = vand.u32 %v31, 4294901760
    %v191 = vsub.f32 %v31, %v190
    %v192 = vand.u32 %v191, 4294901760
    %193 = vmatmul.f32.gmra.mxu0 %v192
    %v194 = vpop.f32.mrf.mxu0
    %v195 = vadd.f32 %v156, %v194
    %v196 = vand.u32 %v34, 4294901760
    %v197 = vsub.f32 %v34, %v196
    %v198 = vand.u32 %v197, 4294901760
    %199 = vmatmul.f32.gmra.mxu0 %v198
    %v200 = vpop.f32.mrf.mxu0
    %v201 = vadd.f32 %v161, %v200
    %v202 = vand.u32 %v37, 4294901760
    %v203 = vsub.f32 %v37, %v202
    %v204 = vand.u32 %v203, 4294901760
    %205 = vmatmul.f32.gmra.mxu0 %v204
    %v206 = vpop.f32.mrf.mxu0
    %v207 = vadd.f32 %v166, %v206
    %v208 = vand.u32 %v40, 4294901760
    %v209 = vsub.f32 %v40, %v208
    %v210 = vand.u32 %v209, 4294901760
    %211 = vmatmul.f32.gmra.mxu0 %v210
    %v212 = vpop.f32.mrf.mxu0
    %v213 = vadd.f32 %v171, %v212
    %214 = vdwg.mxu0
    %215 = vmatpush.msra.mxu0 0.0
    %216 = vmatpush.msra.mxu0 0.0
    %217 = vmatpush.msra.mxu0 0.0
    %218 = vmatpush.msra.mxu0 0.0
    %219 = vmatpush.msra.mxu0 0.0
    %220 = vmatpush.msra.mxu0 0.0
    %221 = vmatpush.msra.mxu0 0.0
    %222 = vmatpush.msra.mxu0 0.0
    %223 = vmatpush.msra.mxu0 0.0
    %224 = vmatpush.msra.mxu0 0.0
    %225 = vmatpush.msra.mxu0 0.0
    %226 = vmatpush.msra.mxu0 0.0
    %227 = vmatpush.msra.mxu0 0.0
    %228 = vmatpush.msra.mxu0 0.0
    %229 = vmatpush.msra.mxu0 0.0
    %v230 = vand.u32 %v44, 4294901760
    %v231 = vsub.f32 %v44, %v230
    %v232 = vand.u32 %v231, 4294901760
    %233 = vmatpush.msra.mxu0 %v232
    %v234 = vand.u32 %v31, 4294901760
    %235 = vmatmul.f32.gmra.mxu0 %v234
    %v236 = vpop.f32.mrf.mxu0
    %v237 = vadd.f32 %v195, %v236
    %v238 = vand.u32 %v34, 4294901760
    %239 = vmatmul.f32.gmra.mxu0 %v238
    %v240 = vpop.f32.mrf.mxu0
    %v241 = vadd.f32 %v201, %v240
    %v242 = vand.u32 %v37, 4294901760
    %243 = vmatmul.f32.gmra.mxu0 %v242
    %v244 = vpop.f32.mrf.mxu0
    %v245 = vadd.f32 %v207, %v244
    %v246 = vand.u32 %v40, 4294901760
    %247 = vmatmul.f32.gmra.mxu0 %v246
    %v248 = vpop.f32.mrf.mxu0
    %v249 = vadd.f32 %v213, %v248
    %250 = vdwg.mxu0
    %251 = vmatpush.msra.mxu0 0.0
    %252 = vmatpush.msra.mxu0 0.0
    %253 = vmatpush.msra.mxu0 0.0
    %254 = vmatpush.msra.mxu0 0.0
    %255 = vmatpush.msra.mxu0 0.0
    %256 = vmatpush.msra.mxu0 0.0
    %257 = vmatpush.msra.mxu0 0.0
    %258 = vmatpush.msra.mxu0 0.0
    %259 = vmatpush.msra.mxu0 0.0
    %260 = vmatpush.msra.mxu0 0.0
    %261 = vmatpush.msra.mxu0 0.0
    %262 = vmatpush.msra.mxu0 0.0
    %263 = vmatpush.msra.mxu0 0.0
    %264 = vmatpush.msra.mxu0 0.0
    %265 = vmatpush.msra.mxu0 0.0
    %v266 = vand.u32 %v44, 4294901760
    %267 = vmatpush.msra.mxu0 %v266
    %v268 = vand.u32 %v31, 4294901760
    %269 = vmatmul.f32.gmra.mxu0 %v268
    %v270 = vpop.f32.mrf.mxu0
    %v271 = vadd.f32 %v237, %v270
    %v272 = vand.u32 %v34, 4294901760
    %273 = vmatmul.f32.gmra.mxu0 %v272
    %v274 = vpop.f32.mrf.mxu0
    %v275 = vadd.f32 %v241, %v274
    %v276 = vand.u32 %v37, 4294901760
    %277 = vmatmul.f32.gmra.mxu0 %v276
    %v278 = vpop.f32.mrf.mxu0
    %v279 = vadd.f32 %v245, %v278
    %v280 = vand.u32 %v40, 4294901760
    %281 = vmatmul.f32.gmra.mxu0 %v280
    %v282 = vpop.f32.mrf.mxu0
    %v283 = vadd.f32 %v249, %v282
    %284 = vdwg.mxu0
    %v285 = vmul.f32 %v271, %v271
    %v286 = vmul.f32 %v275, %v275
    %v287 = vmul.f32 %v279, %v279
    %v288 = vmul.f32 %v283, %v283
    %v289 = vadd.f32 %v285, %v286
    %v290 = vadd.f32 %v289, %v287
    %v291 = vadd.f32 %v290, %v288
    %v292 = vrot.slane %v291, 4
    %v293 = vadd.f32 %v291, %v292
    %v294 = vrot.slane %v293, 2
    %v295 = vadd.f32 %v293, %v294
    %v296 = vrot.slane %v295, 1
    %v297 = vadd.f32 %v295, %v296
    %v298 = vrcp.pop 32.0
    %v299 = vmul.f32 32.0, %v298
    %v300 = vsub.f32 1.0, %v299
    %v301 = vmul.f32 %v298, %v300
    %v302 = vadd.f32 %v298, %v301
    %vm303 = vweird.f32 %v298
    %v304 = vsel %vm303, %v298, %v302
    %v305 = vmul.f32 %v297, %v304
    %v306 = vadd.f32 %v305, 1e-05
    %v307 = vrsqrt.pop %v306
    %v308 = vmul.f32 %v307, %v306
    %v309 = vmul.f32 %v308, %v307
    %v310 = vmul.f32 0.5, %v309
    %v311 = vsub.f32 1.5, %v310
    %v312 = vmul.f32 %v307, %v311
    %vm313 = vweird.f32 %v306
    %vm314 = vweird.f32 %v307
    %vm315 = vmor %vm313, %vm314
    %v316 = vsel %vm315, %v307, %v312
    %v317 = vmul.f32 %v271, %v316
    %v318 = vmul.f32 %v275, %v316
    %v319 = vmul.f32 %v279, %v316
    %v320 = vmul.f32 %v283, %v316
    %v321 = vld [vmem:[%s2] sm:$0xff]
    %v322 = vld [vmem:[%s2 + $0x8] sm:$0xff]
    %v323 = vld [vmem:[%s2 + $0x10] sm:$0xff]
    %v324 = vld [vmem:[%s2 + $0x18] sm:$0xff]
    %326 = vset.pattern.permute.xlu0 0
    %327 = vperm.xlu0 %326, %v321
    %v328 = vpop.permute.xlu0 %327
    %331 = vset.pattern.permute.xlu0 0
    %332 = vperm.xlu0 %331, %v322
    %v333 = vpop.permute.xlu0 %332
    %336 = vset.pattern.permute.xlu0 0
    %337 = vperm.xlu0 %336, %v323
    %v338 = vpop.permute.xlu0 %337
    %341 = vset.pattern.permute.xlu0 0
    %342 = vperm.xlu0 %341, %v324
    %v343 = vpop.permute.xlu0 %342
    %v345 = vmul.f32 %v317, %v328
    %v346 = vmul.f32 %v318, %v333
    %v347 = vmul.f32 %v319, %v338
    %v348 = vmul.f32 %v320, %v343
    %v349 = vld [vmem:[%s3] sm:$0xff]
    %v350 = vld [vmem:[%s3 + $0x8] sm:$0xff]
    %v351 = vld [vmem:[%s3 + $0x10] sm:$0xff]
    %v352 = vld [vmem:[%s3 + $0x18] sm:$0xff]
    %354 = vset.pattern.permute.xlu0 0
    %355 = vperm.xlu0 %354, %v349
    %v356 = vpop.permute.xlu0 %355
    %359 = vset.pattern.permute.xlu0 0
    %360 = vperm.xlu0 %359, %v350
    %v361 = vpop.permute.xlu0 %360
    %364 = vset.pattern.permute.xlu0 0
    %365 = vperm.xlu0 %364, %v351
    %v366 = vpop.permute.xlu0 %365
    %369 = vset.pattern.permute.xlu0 0
    %370 = vperm.xlu0 %369, %v352
    %v371 = vpop.permute.xlu0 %370
    %v373 = vadd.f32 %v345, %v356
    %v374 = vadd.f32 %v346, %v361
    %v375 = vadd.f32 %v347, %v366
    %v376 = vadd.f32 %v348, %v371
    %v377 = vtanh.pop %v373
    %v378 = vtanh.pop %v374
    %v379 = vtanh.pop %v375
    %v380 = vtanh.pop %v376
    %v381 = vld [vmem:[%s4] sm:$0xff]
    %v382 = vld [vmem:[%s4 + $0x8] sm:$0xff]
    %v383 = vld [vmem:[%s4 + $0x10] sm:$0xff]
    %v384 = vld [vmem:[%s4 + $0x18] sm:$0xff]
    %v385 = vld [vmem:[%s4 + $0x20] sm:$0xff]
    %v386 = vld [vmem:[%s4 + $0x28] sm:$0xff]
    %v387 = vld [vmem:[%s4 + $0x30] sm:$0xff]
    %v388 = vld [vmem:[%s4 + $0x38] sm:$0xff]
    %v389 = vld [vmem:[%s4 + $0x40] sm:$0xff]
    %v390 = vld [vmem:[%s4 + $0x48] sm:$0xff]
    %v391 = vld [vmem:[%s4 + $0x50] sm:$0xff]
    %v392 = vld [vmem:[%s4 + $0x58] sm:$0xff]
    %v393 = vld [vmem:[%s4 + $0x60] sm:$0xff]
    %v394 = vld [vmem:[%s4 + $0x68] sm:$0xff]
    %v395 = vld [vmem:[%s4 + $0x70] sm:$0xff]
    %v396 = vld [vmem:[%s4 + $0x78] sm:$0xff]
    %v397 = vld [vmem:[%s4 + $0x80] sm:$0xff]
    %v398 = vld [vmem:[%s4 + $0x88] sm:$0xff]
    %vm399 = vcmask 261120
    %v401 = vsel %vm399, %v381, 0
    %v404 = vsel %vm399, %v382, 0
    %v407 = vsel %vm399, %v383, 0
    %v410 = vsel %vm399, %v384, 0
    %v413 = vsel %vm399, %v385, 0
    %v416 = vsel %vm399, %v386, 0
    %v419 = vsel %vm399, %v387, 0
    %v422 = vsel %vm399, %v388, 0
    %v425 = vsel %vm399, %v389, 0
    %v428 = vsel %vm399, %v390, 0
    %v431 = vsel %vm399, %v391, 0
    %v434 = vsel %vm399, %v392, 0
    %v437 = vsel %vm399, %v393, 0
    %v440 = vsel %vm399, %v394, 0
    %v443 = vsel %vm399, %v395, 0
    %v446 = vsel %vm399, %v396, 0
    %v449 = vsel %vm399, %v397, 0
    %v452 = vsel %vm399, %v398, 0
    %454 = vmatpush.msra.mxu0 0.0
    %455 = vmatpush.msra.mxu0 0.0
    %456 = vmatpush.msra.mxu0 0.0
    %457 = vmatpush.msra.mxu0 0.0
    %458 = vmatpush.msra.mxu0 0.0
    %459 = vmatpush.msra.mxu0 0.0
    %460 = vmatpush.msra.mxu0 0.0
    %461 = vmatpush.msra.mxu0 0.0
    %462 = vmatpush.msra.mxu0 0.0
    %463 = vmatpush.msra.mxu0 0.0
    %464 = vmatpush.msra.mxu0 0.0
    %465 = vmatpush.msra.mxu0 0.0
    %v466 = vand.u32 %v380, 4294901760
    %467 = vmatpush.msra.mxu0 %v466
    %v468 = vand.u32 %v379, 4294901760
    %469 = vmatpush.msra.mxu0 %v468
    %v470 = vand.u32 %v378, 4294901760
    %471 = vmatpush.msra.mxu0 %v470
    %v472 = vand.u32 %v377, 4294901760
    %473 = vmatpush.msra.mxu0 %v472
    %v474 = vand.u32 %v401, 4294901760
    %v475 = vsub.f32 %v401, %v474
    %v476 = vand.u32 %v475, 4294901760
    %v477 = vsub.f32 %v475, %v476
    %v478 = vand.u32 %v477, 4294901760
    %479 = vmatmul.f32.gmra.mxu0 %v478
    %v480 = vpop.f32.mrf.mxu0
    %v481 = vadd.f32 0.0, %v480
    %v482 = vand.u32 %v404, 4294901760
    %v483 = vsub.f32 %v404, %v482
    %v484 = vand.u32 %v483, 4294901760
    %v485 = vsub.f32 %v483, %v484
    %v486 = vand.u32 %v485, 4294901760
    %487 = vmatmul.f32.gmra.mxu0 %v486
    %v488 = vpop.f32.mrf.mxu0
    %v489 = vadd.f32 0.0, %v488
    %v490 = vand.u32 %v407, 4294901760
    %v491 = vsub.f32 %v407, %v490
    %v492 = vand.u32 %v491, 4294901760
    %v493 = vsub.f32 %v491, %v492
    %v494 = vand.u32 %v493, 4294901760
    %495 = vmatmul.f32.gmra.mxu0 %v494
    %v496 = vpop.f32.mrf.mxu0
    %v497 = vadd.f32 0.0, %v496
    %v498 = vand.u32 %v410, 4294901760
    %v499 = vsub.f32 %v410, %v498
    %v500 = vand.u32 %v499, 4294901760
    %v501 = vsub.f32 %v499, %v500
    %v502 = vand.u32 %v501, 4294901760
    %503 = vmatmul.f32.gmra.mxu0 %v502
    %v504 = vpop.f32.mrf.mxu0
    %v505 = vadd.f32 0.0, %v504
    %v506 = vand.u32 %v413, 4294901760
    %v507 = vsub.f32 %v413, %v506
    %v508 = vand.u32 %v507, 4294901760
    %v509 = vsub.f32 %v507, %v508
    %v510 = vand.u32 %v509, 4294901760
    %511 = vmatmul.f32.gmra.mxu0 %v510
    %v512 = vpop.f32.mrf.mxu0
    %v513 = vadd.f32 0.0, %v512
    %v514 = vand.u32 %v416, 4294901760
    %v515 = vsub.f32 %v416, %v514
    %v516 = vand.u32 %v515, 4294901760
    %v517 = vsub.f32 %v515, %v516
    %v518 = vand.u32 %v517, 4294901760
    %519 = vmatmul.f32.gmra.mxu0 %v518
    %v520 = vpop.f32.mrf.mxu0
    %v521 = vadd.f32 0.0, %v520
    %v522 = vand.u32 %v419, 4294901760
    %v523 = vsub.f32 %v419, %v522
    %v524 = vand.u32 %v523, 4294901760
    %v525 = vsub.f32 %v523, %v524
    %v526 = vand.u32 %v525, 4294901760
    %527 = vmatmul.f32.gmra.mxu0 %v526
    %v528 = vpop.f32.mrf.mxu0
    %v529 = vadd.f32 0.0, %v528
    %v530 = vand.u32 %v422, 4294901760
    %v531 = vsub.f32 %v422, %v530
    %v532 = vand.u32 %v531, 4294901760
    %v533 = vsub.f32 %v531, %v532
    %v534 = vand.u32 %v533, 4294901760
    %535 = vmatmul.f32.gmra.mxu0 %v534
    %v536 = vpop.f32.mrf.mxu0
    %v537 = vadd.f32 0.0, %v536
    %v538 = vand.u32 %v425, 4294901760
    %v539 = vsub.f32 %v425, %v538
    %v540 = vand.u32 %v539, 4294901760
    %v541 = vsub.f32 %v539, %v540
    %v542 = vand.u32 %v541, 4294901760
    %543 = vmatmul.f32.gmra.mxu0 %v542
    %v544 = vpop.f32.mrf.mxu0
    %v545 = vadd.f32 0.0, %v544
    %v546 = vand.u32 %v428, 4294901760
    %v547 = vsub.f32 %v428, %v546
    %v548 = vand.u32 %v547, 4294901760
    %v549 = vsub.f32 %v547, %v548
    %v550 = vand.u32 %v549, 4294901760
    %551 = vmatmul.f32.gmra.mxu0 %v550
    %v552 = vpop.f32.mrf.mxu0
    %v553 = vadd.f32 0.0, %v552
    %v554 = vand.u32 %v431, 4294901760
    %v555 = vsub.f32 %v431, %v554
    %v556 = vand.u32 %v555, 4294901760
    %v557 = vsub.f32 %v555, %v556
    %v558 = vand.u32 %v557, 4294901760
    %559 = vmatmul.f32.gmra.mxu0 %v558
    %v560 = vpop.f32.mrf.mxu0
    %v561 = vadd.f32 0.0, %v560
    %v562 = vand.u32 %v434, 4294901760
    %v563 = vsub.f32 %v434, %v562
    %v564 = vand.u32 %v563, 4294901760
    %v565 = vsub.f32 %v563, %v564
    %v566 = vand.u32 %v565, 4294901760
    %567 = vmatmul.f32.gmra.mxu0 %v566
    %v568 = vpop.f32.mrf.mxu0
    %v569 = vadd.f32 0.0, %v568
    %v570 = vand.u32 %v437, 4294901760
    %v571 = vsub.f32 %v437, %v570
    %v572 = vand.u32 %v571, 4294901760
    %v573 = vsub.f32 %v571, %v572
    %v574 = vand.u32 %v573, 4294901760
    %575 = vmatmul.f32.gmra.mxu0 %v574
    %v576 = vpop.f32.mrf.mxu0
    %v577 = vadd.f32 0.0, %v576
    %v578 = vand.u32 %v440, 4294901760
    %v579 = vsub.f32 %v440, %v578
    %v580 = vand.u32 %v579, 4294901760
    %v581 = vsub.f32 %v579, %v580
    %v582 = vand.u32 %v581, 4294901760
    %583 = vmatmul.f32.gmra.mxu0 %v582
    %v584 = vpop.f32.mrf.mxu0
    %v585 = vadd.f32 0.0, %v584
    %v586 = vand.u32 %v443, 4294901760
    %v587 = vsub.f32 %v443, %v586
    %v588 = vand.u32 %v587, 4294901760
    %v589 = vsub.f32 %v587, %v588
    %v590 = vand.u32 %v589, 4294901760
    %591 = vmatmul.f32.gmra.mxu0 %v590
    %v592 = vpop.f32.mrf.mxu0
    %v593 = vadd.f32 0.0, %v592
    %v594 = vand.u32 %v446, 4294901760
    %v595 = vsub.f32 %v446, %v594
    %v596 = vand.u32 %v595, 4294901760
    %v597 = vsub.f32 %v595, %v596
    %v598 = vand.u32 %v597, 4294901760
    %599 = vmatmul.f32.gmra.mxu0 %v598
    %v600 = vpop.f32.mrf.mxu0
    %v601 = vadd.f32 0.0, %v600
    %v602 = vand.u32 %v449, 4294901760
    %v603 = vsub.f32 %v449, %v602
    %v604 = vand.u32 %v603, 4294901760
    %v605 = vsub.f32 %v603, %v604
    %v606 = vand.u32 %v605, 4294901760
    %607 = vmatmul.f32.gmra.mxu0 %v606
    %v608 = vpop.f32.mrf.mxu0
    %v609 = vadd.f32 0.0, %v608
    %v610 = vand.u32 %v452, 4294901760
    %v611 = vsub.f32 %v452, %v610
    %v612 = vand.u32 %v611, 4294901760
    %v613 = vsub.f32 %v611, %v612
    %v614 = vand.u32 %v613, 4294901760
    %615 = vmatmul.f32.gmra.mxu0 %v614
    %v616 = vpop.f32.mrf.mxu0
    %v617 = vadd.f32 0.0, %v616
    %618 = vdwg.mxu0
    %619 = vmatpush.msra.mxu0 0.0
    %620 = vmatpush.msra.mxu0 0.0
    %621 = vmatpush.msra.mxu0 0.0
    %622 = vmatpush.msra.mxu0 0.0
    %623 = vmatpush.msra.mxu0 0.0
    %624 = vmatpush.msra.mxu0 0.0
    %625 = vmatpush.msra.mxu0 0.0
    %626 = vmatpush.msra.mxu0 0.0
    %627 = vmatpush.msra.mxu0 0.0
    %628 = vmatpush.msra.mxu0 0.0
    %629 = vmatpush.msra.mxu0 0.0
    %630 = vmatpush.msra.mxu0 0.0
    %v631 = vand.u32 %v380, 4294901760
    %v632 = vsub.f32 %v380, %v631
    %v633 = vand.u32 %v632, 4294901760
    %v634 = vsub.f32 %v632, %v633
    %v635 = vand.u32 %v634, 4294901760
    %636 = vmatpush.msra.mxu0 %v635
    %v637 = vand.u32 %v379, 4294901760
    %v638 = vsub.f32 %v379, %v637
    %v639 = vand.u32 %v638, 4294901760
    %v640 = vsub.f32 %v638, %v639
    %v641 = vand.u32 %v640, 4294901760
    %642 = vmatpush.msra.mxu0 %v641
    %v643 = vand.u32 %v378, 4294901760
    %v644 = vsub.f32 %v378, %v643
    %v645 = vand.u32 %v644, 4294901760
    %v646 = vsub.f32 %v644, %v645
    %v647 = vand.u32 %v646, 4294901760
    %648 = vmatpush.msra.mxu0 %v647
    %v649 = vand.u32 %v377, 4294901760
    %v650 = vsub.f32 %v377, %v649
    %v651 = vand.u32 %v650, 4294901760
    %v652 = vsub.f32 %v650, %v651
    %v653 = vand.u32 %v652, 4294901760
    %654 = vmatpush.msra.mxu0 %v653
    %v655 = vand.u32 %v401, 4294901760
    %656 = vmatmul.f32.gmra.mxu0 %v655
    %v657 = vpop.f32.mrf.mxu0
    %v658 = vadd.f32 %v481, %v657
    %v659 = vand.u32 %v404, 4294901760
    %660 = vmatmul.f32.gmra.mxu0 %v659
    %v661 = vpop.f32.mrf.mxu0
    %v662 = vadd.f32 %v489, %v661
    %v663 = vand.u32 %v407, 4294901760
    %664 = vmatmul.f32.gmra.mxu0 %v663
    %v665 = vpop.f32.mrf.mxu0
    %v666 = vadd.f32 %v497, %v665
    %v667 = vand.u32 %v410, 4294901760
    %668 = vmatmul.f32.gmra.mxu0 %v667
    %v669 = vpop.f32.mrf.mxu0
    %v670 = vadd.f32 %v505, %v669
    %v671 = vand.u32 %v413, 4294901760
    %672 = vmatmul.f32.gmra.mxu0 %v671
    %v673 = vpop.f32.mrf.mxu0
    %v674 = vadd.f32 %v513, %v673
    %v675 = vand.u32 %v416, 4294901760
    %676 = vmatmul.f32.gmra.mxu0 %v675
    %v677 = vpop.f32.mrf.mxu0
    %v678 = vadd.f32 %v521, %v677
    %v679 = vand.u32 %v419, 4294901760
    %680 = vmatmul.f32.gmra.mxu0 %v679
    %v681 = vpop.f32.mrf.mxu0
    %v682 = vadd.f32 %v529, %v681
    %v683 = vand.u32 %v422, 4294901760
    %684 = vmatmul.f32.gmra.mxu0 %v683
    %v685 = vpop.f32.mrf.mxu0
    %v686 = vadd.f32 %v537, %v685
    %v687 = vand.u32 %v425, 4294901760
    %688 = vmatmul.f32.gmra.mxu0 %v687
    %v689 = vpop.f32.mrf.mxu0
    %v690 = vadd.f32 %v545, %v689
    %v691 = vand.u32 %v428, 4294901760
    %692 = vmatmul.f32.gmra.mxu0 %v691
    %v693 = vpop.f32.mrf.mxu0
    %v694 = vadd.f32 %v553, %v693
    %v695 = vand.u32 %v431, 4294901760
    %696 = vmatmul.f32.gmra.mxu0 %v695
    %v697 = vpop.f32.mrf.mxu0
    %v698 = vadd.f32 %v561, %v697
    %v699 = vand.u32 %v434, 4294901760
    %700 = vmatmul.f32.gmra.mxu0 %v699
    %v701 = vpop.f32.mrf.mxu0
    %v702 = vadd.f32 %v569, %v701
    %v703 = vand.u32 %v437, 4294901760
    %704 = vmatmul.f32.gmra.mxu0 %v703
    %v705 = vpop.f32.mrf.mxu0
    %v706 = vadd.f32 %v577, %v705
    %v707 = vand.u32 %v440, 4294901760
    %708 = vmatmul.f32.gmra.mxu0 %v707
    %v709 = vpop.f32.mrf.mxu0
    %v710 = vadd.f32 %v585, %v709
    %v711 = vand.u32 %v443, 4294901760
    %712 = vmatmul.f32.gmra.mxu0 %v711
    %v713 = vpop.f32.mrf.mxu0
    %v714 = vadd.f32 %v593, %v713
    %v715 = vand.u32 %v446, 4294901760
    %716 = vmatmul.f32.gmra.mxu0 %v715
    %v717 = vpop.f32.mrf.mxu0
    %v718 = vadd.f32 %v601, %v717
    %v719 = vand.u32 %v449, 4294901760
    %720 = vmatmul.f32.gmra.mxu0 %v719
    %v721 = vpop.f32.mrf.mxu0
    %v722 = vadd.f32 %v609, %v721
    %v723 = vand.u32 %v452, 4294901760
    %724 = vmatmul.f32.gmra.mxu0 %v723
    %v725 = vpop.f32.mrf.mxu0
    %v726 = vadd.f32 %v617, %v725
    %727 = vdwg.mxu0
    %728 = vmatpush.msra.mxu0 0.0
    %729 = vmatpush.msra.mxu0 0.0
    %730 = vmatpush.msra.mxu0 0.0
    %731 = vmatpush.msra.mxu0 0.0
    %732 = vmatpush.msra.mxu0 0.0
    %733 = vmatpush.msra.mxu0 0.0
    %734 = vmatpush.msra.mxu0 0.0
    %735 = vmatpush.msra.mxu0 0.0
    %736 = vmatpush.msra.mxu0 0.0
    %737 = vmatpush.msra.mxu0 0.0
    %738 = vmatpush.msra.mxu0 0.0
    %739 = vmatpush.msra.mxu0 0.0
    %v740 = vand.u32 %v380, 4294901760
    %v741 = vsub.f32 %v380, %v740
    %742 = vmatpush.msra.mxu0 %v741
    %v743 = vand.u32 %v379, 4294901760
    %v744 = vsub.f32 %v379, %v743
    %745 = vmatpush.msra.mxu0 %v744
    %v746 = vand.u32 %v378, 4294901760
    %v747 = vsub.f32 %v378, %v746
    %748 = vmatpush.msra.mxu0 %v747
    %v749 = vand.u32 %v377, 4294901760
    %v750 = vsub.f32 %v377, %v749
    %751 = vmatpush.msra.mxu0 %v750
    %v752 = vand.u32 %v401, 4294901760
    %v753 = vsub.f32 %v401, %v752
    %754 = vmatmul.f32.gmra.mxu0 %v753
    %v755 = vpop.f32.mrf.mxu0
    %v756 = vadd.f32 %v658, %v755
    %v757 = vand.u32 %v404, 4294901760
    %v758 = vsub.f32 %v404, %v757
    %759 = vmatmul.f32.gmra.mxu0 %v758
    %v760 = vpop.f32.mrf.mxu0
    %v761 = vadd.f32 %v662, %v760
    %v762 = vand.u32 %v407, 4294901760
    %v763 = vsub.f32 %v407, %v762
    %764 = vmatmul.f32.gmra.mxu0 %v763
    %v765 = vpop.f32.mrf.mxu0
    %v766 = vadd.f32 %v666, %v765
    %v767 = vand.u32 %v410, 4294901760
    %v768 = vsub.f32 %v410, %v767
    %769 = vmatmul.f32.gmra.mxu0 %v768
    %v770 = vpop.f32.mrf.mxu0
    %v771 = vadd.f32 %v670, %v770
    %v772 = vand.u32 %v413, 4294901760
    %v773 = vsub.f32 %v413, %v772
    %774 = vmatmul.f32.gmra.mxu0 %v773
    %v775 = vpop.f32.mrf.mxu0
    %v776 = vadd.f32 %v674, %v775
    %v777 = vand.u32 %v416, 4294901760
    %v778 = vsub.f32 %v416, %v777
    %779 = vmatmul.f32.gmra.mxu0 %v778
    %v780 = vpop.f32.mrf.mxu0
    %v781 = vadd.f32 %v678, %v780
    %v782 = vand.u32 %v419, 4294901760
    %v783 = vsub.f32 %v419, %v782
    %784 = vmatmul.f32.gmra.mxu0 %v783
    %v785 = vpop.f32.mrf.mxu0
    %v786 = vadd.f32 %v682, %v785
    %v787 = vand.u32 %v422, 4294901760
    %v788 = vsub.f32 %v422, %v787
    %789 = vmatmul.f32.gmra.mxu0 %v788
    %v790 = vpop.f32.mrf.mxu0
    %v791 = vadd.f32 %v686, %v790
    %v792 = vand.u32 %v425, 4294901760
    %v793 = vsub.f32 %v425, %v792
    %794 = vmatmul.f32.gmra.mxu0 %v793
    %v795 = vpop.f32.mrf.mxu0
    %v796 = vadd.f32 %v690, %v795
    %v797 = vand.u32 %v428, 4294901760
    %v798 = vsub.f32 %v428, %v797
    %799 = vmatmul.f32.gmra.mxu0 %v798
    %v800 = vpop.f32.mrf.mxu0
    %v801 = vadd.f32 %v694, %v800
    %v802 = vand.u32 %v431, 4294901760
    %v803 = vsub.f32 %v431, %v802
    %804 = vmatmul.f32.gmra.mxu0 %v803
    %v805 = vpop.f32.mrf.mxu0
    %v806 = vadd.f32 %v698, %v805
    %v807 = vand.u32 %v434, 4294901760
    %v808 = vsub.f32 %v434, %v807
    %809 = vmatmul.f32.gmra.mxu0 %v808
    %v810 = vpop.f32.mrf.mxu0
    %v811 = vadd.f32 %v702, %v810
    %v812 = vand.u32 %v437, 4294901760
    %v813 = vsub.f32 %v437, %v812
    %814 = vmatmul.f32.gmra.mxu0 %v813
    %v815 = vpop.f32.mrf.mxu0
    %v816 = vadd.f32 %v706, %v815
    %v817 = vand.u32 %v440, 4294901760
    %v818 = vsub.f32 %v440, %v817
    %819 = vmatmul.f32.gmra.mxu0 %v818
    %v820 = vpop.f32.mrf.mxu0
    %v821 = vadd.f32 %v710, %v820
    %v822 = vand.u32 %v443, 4294901760
    %v823 = vsub.f32 %v443, %v822
    %824 = vmatmul.f32.gmra.mxu0 %v823
    %v825 = vpop.f32.mrf.mxu0
    %v826 = vadd.f32 %v714, %v825
    %v827 = vand.u32 %v446, 4294901760
    %v828 = vsub.f32 %v446, %v827
    %829 = vmatmul.f32.gmra.mxu0 %v828
    %v830 = vpop.f32.mrf.mxu0
    %v831 = vadd.f32 %v718, %v830
    %v832 = vand.u32 %v449, 4294901760
    %v833 = vsub.f32 %v449, %v832
    %834 = vmatmul.f32.gmra.mxu0 %v833
    %v835 = vpop.f32.mrf.mxu0
    %v836 = vadd.f32 %v722, %v835
    %v837 = vand.u32 %v452, 4294901760
    %v838 = vsub.f32 %v452, %v837
    %839 = vmatmul.f32.gmra.mxu0 %v838
    %v840 = vpop.f32.mrf.mxu0
    %v841 = vadd.f32 %v726, %v840
    %842 = vdwg.mxu0
    %843 = vmatpush.msra.mxu0 0.0
    %844 = vmatpush.msra.mxu0 0.0
    %845 = vmatpush.msra.mxu0 0.0
    %846 = vmatpush.msra.mxu0 0.0
    %847 = vmatpush.msra.mxu0 0.0
    %848 = vmatpush.msra.mxu0 0.0
    %849 = vmatpush.msra.mxu0 0.0
    %850 = vmatpush.msra.mxu0 0.0
    %851 = vmatpush.msra.mxu0 0.0
    %852 = vmatpush.msra.mxu0 0.0
    %853 = vmatpush.msra.mxu0 0.0
    %854 = vmatpush.msra.mxu0 0.0
    %v855 = vand.u32 %v380, 4294901760
    %856 = vmatpush.msra.mxu0 %v855
    %v857 = vand.u32 %v379, 4294901760
    %858 = vmatpush.msra.mxu0 %v857
    %v859 = vand.u32 %v378, 4294901760
    %860 = vmatpush.msra.mxu0 %v859
    %v861 = vand.u32 %v377, 4294901760
    %862 = vmatpush.msra.mxu0 %v861
    %v863 = vand.u32 %v401, 4294901760
    %v864 = vsub.f32 %v401, %v863
    %v865 = vand.u32 %v864, 4294901760
    %866 = vmatmul.f32.gmra.mxu0 %v865
    %v867 = vpop.f32.mrf.mxu0
    %v868 = vadd.f32 %v756, %v867
    %v869 = vand.u32 %v404, 4294901760
    %v870 = vsub.f32 %v404, %v869
    %v871 = vand.u32 %v870, 4294901760
    %872 = vmatmul.f32.gmra.mxu0 %v871
    %v873 = vpop.f32.mrf.mxu0
    %v874 = vadd.f32 %v761, %v873
    %v875 = vand.u32 %v407, 4294901760
    %v876 = vsub.f32 %v407, %v875
    %v877 = vand.u32 %v876, 4294901760
    %878 = vmatmul.f32.gmra.mxu0 %v877
    %v879 = vpop.f32.mrf.mxu0
    %v880 = vadd.f32 %v766, %v879
    %v881 = vand.u32 %v410, 4294901760
    %v882 = vsub.f32 %v410, %v881
    %v883 = vand.u32 %v882, 4294901760
    %884 = vmatmul.f32.gmra.mxu0 %v883
    %v885 = vpop.f32.mrf.mxu0
    %v886 = vadd.f32 %v771, %v885
    %v887 = vand.u32 %v413, 4294901760
    %v888 = vsub.f32 %v413, %v887
    %v889 = vand.u32 %v888, 4294901760
    %890 = vmatmul.f32.gmra.mxu0 %v889
    %v891 = vpop.f32.mrf.mxu0
    %v892 = vadd.f32 %v776, %v891
    %v893 = vand.u32 %v416, 4294901760
    %v894 = vsub.f32 %v416, %v893
    %v895 = vand.u32 %v894, 4294901760
    %896 = vmatmul.f32.gmra.mxu0 %v895
    %v897 = vpop.f32.mrf.mxu0
    %v898 = vadd.f32 %v781, %v897
    %v899 = vand.u32 %v419, 4294901760
    %v900 = vsub.f32 %v419, %v899
    %v901 = vand.u32 %v900, 4294901760
    %902 = vmatmul.f32.gmra.mxu0 %v901
    %v903 = vpop.f32.mrf.mxu0
    %v904 = vadd.f32 %v786, %v903
    %v905 = vand.u32 %v422, 4294901760
    %v906 = vsub.f32 %v422, %v905
    %v907 = vand.u32 %v906, 4294901760
    %908 = vmatmul.f32.gmra.mxu0 %v907
    %v909 = vpop.f32.mrf.mxu0
    %v910 = vadd.f32 %v791, %v909
    %v911 = vand.u32 %v425, 4294901760
    %v912 = vsub.f32 %v425, %v911
    %v913 = vand.u32 %v912, 4294901760
    %914 = vmatmul.f32.gmra.mxu0 %v913
    %v915 = vpop.f32.mrf.mxu0
    %v916 = vadd.f32 %v796, %v915
    %v917 = vand.u32 %v428, 4294901760
    %v918 = vsub.f32 %v428, %v917
    %v919 = vand.u32 %v918, 4294901760
    %920 = vmatmul.f32.gmra.mxu0 %v919
    %v921 = vpop.f32.mrf.mxu0
    %v922 = vadd.f32 %v801, %v921
    %v923 = vand.u32 %v431, 4294901760
    %v924 = vsub.f32 %v431, %v923
    %v925 = vand.u32 %v924, 4294901760
    %926 = vmatmul.f32.gmra.mxu0 %v925
    %v927 = vpop.f32.mrf.mxu0
    %v928 = vadd.f32 %v806, %v927
    %v929 = vand.u32 %v434, 4294901760
    %v930 = vsub.f32 %v434, %v929
    %v931 = vand.u32 %v930, 4294901760
    %932 = vmatmul.f32.gmra.mxu0 %v931
    %v933 = vpop.f32.mrf.mxu0
    %v934 = vadd.f32 %v811, %v933
    %v935 = vand.u32 %v437, 4294901760
    %v936 = vsub.f32 %v437, %v935
    %v937 = vand.u32 %v936, 4294901760
    %938 = vmatmul.f32.gmra.mxu0 %v937
    %v939 = vpop.f32.mrf.mxu0
    %v940 = vadd.f32 %v816, %v939
    %v941 = vand.u32 %v440, 4294901760
    %v942 = vsub.f32 %v440, %v941
    %v943 = vand.u32 %v942, 4294901760
    %944 = vmatmul.f32.gmra.mxu0 %v943
    %v945 = vpop.f32.mrf.mxu0
    %v946 = vadd.f32 %v821, %v945
    %v947 = vand.u32 %v443, 4294901760
    %v948 = vsub.f32 %v443, %v947
    %v949 = vand.u32 %v948, 4294901760
    %950 = vmatmul.f32.gmra.mxu0 %v949
    %v951 = vpop.f32.mrf.mxu0
    %v952 = vadd.f32 %v826, %v951
    %v953 = vand.u32 %v446, 4294901760
    %v954 = vsub.f32 %v446, %v953
    %v955 = vand.u32 %v954, 4294901760
    %956 = vmatmul.f32.gmra.mxu0 %v955
    %v957 = vpop.f32.mrf.mxu0
    %v958 = vadd.f32 %v831, %v957
    %v959 = vand.u32 %v449, 4294901760
    %v960 = vsub.f32 %v449, %v959
    %v961 = vand.u32 %v960, 4294901760
    %962 = vmatmul.f32.gmra.mxu0 %v961
    %v963 = vpop.f32.mrf.mxu0
    %v964 = vadd.f32 %v836, %v963
    %v965 = vand.u32 %v452, 4294901760
    %v966 = vsub.f32 %v452, %v965
    %v967 = vand.u32 %v966, 4294901760
    %968 = vmatmul.f32.gmra.mxu0 %v967
    %v969 = vpop.f32.mrf.mxu0
    %v970 = vadd.f32 %v841, %v969
    %971 = vdwg.mxu0
    %972 = vmatpush.msra.mxu0 0.0
    %973 = vmatpush.msra.mxu0 0.0
    %974 = vmatpush.msra.mxu0 0.0
    %975 = vmatpush.msra.mxu0 0.0
    %976 = vmatpush.msra.mxu0 0.0
    %977 = vmatpush.msra.mxu0 0.0
    %978 = vmatpush.msra.mxu0 0.0
    %979 = vmatpush.msra.mxu0 0.0
    %980 = vmatpush.msra.mxu0 0.0
    %981 = vmatpush.msra.mxu0 0.0
    %982 = vmatpush.msra.mxu0 0.0
    %983 = vmatpush.msra.mxu0 0.0
    %v984 = vand.u32 %v380, 4294901760
    %v985 = vsub.f32 %v380, %v984
    %v986 = vand.u32 %v985, 4294901760
    %987 = vmatpush.msra.mxu0 %v986
    %v988 = vand.u32 %v379, 4294901760
    %v989 = vsub.f32 %v379, %v988
    %v990 = vand.u32 %v989, 4294901760
    %991 = vmatpush.msra.mxu0 %v990
    %v992 = vand.u32 %v378, 4294901760
    %v993 = vsub.f32 %v378, %v992
    %v994 = vand.u32 %v993, 4294901760
    %995 = vmatpush.msra.mxu0 %v994
    %v996 = vand.u32 %v377, 4294901760
    %v997 = vsub.f32 %v377, %v996
    %v998 = vand.u32 %v997, 4294901760
    %999 = vmatpush.msra.mxu0 %v998
    %v1000 = vand.u32 %v401, 4294901760
    %1001 = vmatmul.f32.gmra.mxu0 %v1000
    %v1002 = vpop.f32.mrf.mxu0
    %v1003 = vadd.f32 %v868, %v1002
    %v1004 = vand.u32 %v404, 4294901760
    %1005 = vmatmul.f32.gmra.mxu0 %v1004
    %v1006 = vpop.f32.mrf.mxu0
    %v1007 = vadd.f32 %v874, %v1006
    %v1008 = vand.u32 %v407, 4294901760
    %1009 = vmatmul.f32.gmra.mxu0 %v1008
    %v1010 = vpop.f32.mrf.mxu0
    %v1011 = vadd.f32 %v880, %v1010
    %v1012 = vand.u32 %v410, 4294901760
    %1013 = vmatmul.f32.gmra.mxu0 %v1012
    %v1014 = vpop.f32.mrf.mxu0
    %v1015 = vadd.f32 %v886, %v1014
    %v1016 = vand.u32 %v413, 4294901760
    %1017 = vmatmul.f32.gmra.mxu0 %v1016
    %v1018 = vpop.f32.mrf.mxu0
    %v1019 = vadd.f32 %v892, %v1018
    %v1020 = vand.u32 %v416, 4294901760
    %1021 = vmatmul.f32.gmra.mxu0 %v1020
    %v1022 = vpop.f32.mrf.mxu0
    %v1023 = vadd.f32 %v898, %v1022
    %v1024 = vand.u32 %v419, 4294901760
    %1025 = vmatmul.f32.gmra.mxu0 %v1024
    %v1026 = vpop.f32.mrf.mxu0
    %v1027 = vadd.f32 %v904, %v1026
    %v1028 = vand.u32 %v422, 4294901760
    %1029 = vmatmul.f32.gmra.mxu0 %v1028
    %v1030 = vpop.f32.mrf.mxu0
    %v1031 = vadd.f32 %v910, %v1030
    %v1032 = vand.u32 %v425, 4294901760
    %1033 = vmatmul.f32.gmra.mxu0 %v1032
    %v1034 = vpop.f32.mrf.mxu0
    %v1035 = vadd.f32 %v916, %v1034
    %v1036 = vand.u32 %v428, 4294901760
    %1037 = vmatmul.f32.gmra.mxu0 %v1036
    %v1038 = vpop.f32.mrf.mxu0
    %v1039 = vadd.f32 %v922, %v1038
    %v1040 = vand.u32 %v431, 4294901760
    %1041 = vmatmul.f32.gmra.mxu0 %v1040
    %v1042 = vpop.f32.mrf.mxu0
    %v1043 = vadd.f32 %v928, %v1042
    %v1044 = vand.u32 %v434, 4294901760
    %1045 = vmatmul.f32.gmra.mxu0 %v1044
    %v1046 = vpop.f32.mrf.mxu0
    %v1047 = vadd.f32 %v934, %v1046
    %v1048 = vand.u32 %v437, 4294901760
    %1049 = vmatmul.f32.gmra.mxu0 %v1048
    %v1050 = vpop.f32.mrf.mxu0
    %v1051 = vadd.f32 %v940, %v1050
    %v1052 = vand.u32 %v440, 4294901760
    %1053 = vmatmul.f32.gmra.mxu0 %v1052
    %v1054 = vpop.f32.mrf.mxu0
    %v1055 = vadd.f32 %v946, %v1054
    %v1056 = vand.u32 %v443, 4294901760
    %1057 = vmatmul.f32.gmra.mxu0 %v1056
    %v1058 = vpop.f32.mrf.mxu0
    %v1059 = vadd.f32 %v952, %v1058
    %v1060 = vand.u32 %v446, 4294901760
    %1061 = vmatmul.f32.gmra.mxu0 %v1060
    %v1062 = vpop.f32.mrf.mxu0
    %v1063 = vadd.f32 %v958, %v1062
    %v1064 = vand.u32 %v449, 4294901760
    %1065 = vmatmul.f32.gmra.mxu0 %v1064
    %v1066 = vpop.f32.mrf.mxu0
    %v1067 = vadd.f32 %v964, %v1066
    %v1068 = vand.u32 %v452, 4294901760
    %1069 = vmatmul.f32.gmra.mxu0 %v1068
    %v1070 = vpop.f32.mrf.mxu0
    %v1071 = vadd.f32 %v970, %v1070
    %1072 = vdwg.mxu0
    %1073 = vmatpush.msra.mxu0 0.0
    %1074 = vmatpush.msra.mxu0 0.0
    %1075 = vmatpush.msra.mxu0 0.0
    %1076 = vmatpush.msra.mxu0 0.0
    %1077 = vmatpush.msra.mxu0 0.0
    %1078 = vmatpush.msra.mxu0 0.0
    %1079 = vmatpush.msra.mxu0 0.0
    %1080 = vmatpush.msra.mxu0 0.0
    %1081 = vmatpush.msra.mxu0 0.0
    %1082 = vmatpush.msra.mxu0 0.0
    %1083 = vmatpush.msra.mxu0 0.0
    %1084 = vmatpush.msra.mxu0 0.0
    %v1085 = vand.u32 %v380, 4294901760
    %1086 = vmatpush.msra.mxu0 %v1085
    %v1087 = vand.u32 %v379, 4294901760
    %1088 = vmatpush.msra.mxu0 %v1087
    %v1089 = vand.u32 %v378, 4294901760
    %1090 = vmatpush.msra.mxu0 %v1089
    %v1091 = vand.u32 %v377, 4294901760
    %1092 = vmatpush.msra.mxu0 %v1091
    %v1093 = vand.u32 %v401, 4294901760
    %1094 = vmatmul.f32.gmra.mxu0 %v1093
    %v1095 = vpop.f32.mrf.mxu0
    %v1096 = vadd.f32 %v1003, %v1095
    %v1097 = vand.u32 %v404, 4294901760
    %1098 = vmatmul.f32.gmra.mxu0 %v1097
    %v1099 = vpop.f32.mrf.mxu0
    %v1100 = vadd.f32 %v1007, %v1099
    %v1101 = vand.u32 %v407, 4294901760
    %1102 = vmatmul.f32.gmra.mxu0 %v1101
    %v1103 = vpop.f32.mrf.mxu0
    %v1104 = vadd.f32 %v1011, %v1103
    %v1105 = vand.u32 %v410, 4294901760
    %1106 = vmatmul.f32.gmra.mxu0 %v1105
    %v1107 = vpop.f32.mrf.mxu0
    %v1108 = vadd.f32 %v1015, %v1107
    %v1109 = vand.u32 %v413, 4294901760
    %1110 = vmatmul.f32.gmra.mxu0 %v1109
    %v1111 = vpop.f32.mrf.mxu0
    %v1112 = vadd.f32 %v1019, %v1111
    %v1113 = vand.u32 %v416, 4294901760
    %1114 = vmatmul.f32.gmra.mxu0 %v1113
    %v1115 = vpop.f32.mrf.mxu0
    %v1116 = vadd.f32 %v1023, %v1115
    %v1117 = vand.u32 %v419, 4294901760
    %1118 = vmatmul.f32.gmra.mxu0 %v1117
    %v1119 = vpop.f32.mrf.mxu0
    %v1120 = vadd.f32 %v1027, %v1119
    %v1121 = vand.u32 %v422, 4294901760
    %1122 = vmatmul.f32.gmra.mxu0 %v1121
    %v1123 = vpop.f32.mrf.mxu0
    %v1124 = vadd.f32 %v1031, %v1123
    %v1125 = vand.u32 %v425, 4294901760
    %1126 = vmatmul.f32.gmra.mxu0 %v1125
    %v1127 = vpop.f32.mrf.mxu0
    %v1128 = vadd.f32 %v1035, %v1127
    %v1129 = vand.u32 %v428, 4294901760
    %1130 = vmatmul.f32.gmra.mxu0 %v1129
    %v1131 = vpop.f32.mrf.mxu0
    %v1132 = vadd.f32 %v1039, %v1131
    %v1133 = vand.u32 %v431, 4294901760
    %1134 = vmatmul.f32.gmra.mxu0 %v1133
    %v1135 = vpop.f32.mrf.mxu0
    %v1136 = vadd.f32 %v1043, %v1135
    %v1137 = vand.u32 %v434, 4294901760
    %1138 = vmatmul.f32.gmra.mxu0 %v1137
    %v1139 = vpop.f32.mrf.mxu0
    %v1140 = vadd.f32 %v1047, %v1139
    %v1141 = vand.u32 %v437, 4294901760
    %1142 = vmatmul.f32.gmra.mxu0 %v1141
    %v1143 = vpop.f32.mrf.mxu0
    %v1144 = vadd.f32 %v1051, %v1143
    %v1145 = vand.u32 %v440, 4294901760
    %1146 = vmatmul.f32.gmra.mxu0 %v1145
    %v1147 = vpop.f32.mrf.mxu0
    %v1148 = vadd.f32 %v1055, %v1147
    %v1149 = vand.u32 %v443, 4294901760
    %1150 = vmatmul.f32.gmra.mxu0 %v1149
    %v1151 = vpop.f32.mrf.mxu0
    %v1152 = vadd.f32 %v1059, %v1151
    %v1153 = vand.u32 %v446, 4294901760
    %1154 = vmatmul.f32.gmra.mxu0 %v1153
    %v1155 = vpop.f32.mrf.mxu0
    %v1156 = vadd.f32 %v1063, %v1155
    %v1157 = vand.u32 %v449, 4294901760
    %1158 = vmatmul.f32.gmra.mxu0 %v1157
    %v1159 = vpop.f32.mrf.mxu0
    %v1160 = vadd.f32 %v1067, %v1159
    %v1161 = vand.u32 %v452, 4294901760
    %1162 = vmatmul.f32.gmra.mxu0 %v1161
    %v1163 = vpop.f32.mrf.mxu0
    %v1164 = vadd.f32 %v1071, %v1163
    %1165 = vdwg.mxu0
    %v1166 = vld [vmem:[%s5] sm:$0xff]
    %v1167 = vld [vmem:[%s5 + $0x8] sm:$0xff]
    %1169 = vset.pattern.permute.xlu0 0
    %1170 = vperm.xlu0 %1169, %v1166
    %v1171 = vpop.permute.xlu0 %1170
    %1174 = vset.pattern.permute.xlu0 0
    %1175 = vperm.xlu0 %1174, %v1167
    %v1176 = vpop.permute.xlu0 %1175
    %v1178 = vadd.f32 %v1160, %v1171
    %v1179 = vadd.f32 %v1164, %v1176
    %v1180 = vmul.f32 %v1096, %v1128
    %v1181 = vmul.f32 %v1100, %v1132
    %v1182 = vadd.f32 %v1178, %v1180
    %v1183 = vadd.f32 %v1179, %v1181
    %v1184 = vmul.f32 %v1104, %v1136
    %v1185 = vmul.f32 %v1108, %v1140
    %v1186 = vadd.f32 %v1182, %v1184
    %v1187 = vadd.f32 %v1183, %v1185
    %v1188 = vmul.f32 %v1112, %v1144
    %v1189 = vmul.f32 %v1116, %v1148
    %v1190 = vadd.f32 %v1186, %v1188
    %v1191 = vadd.f32 %v1187, %v1189
    %v1192 = vmul.f32 %v1120, %v1152
    %v1193 = vmul.f32 %v1124, %v1156
    %v1194 = vadd.f32 %v1190, %v1192
    %v1195 = vadd.f32 %v1191, %v1193
    %1196 = vst [vmem:[#allocation2] sm:$0xff] %v1194
    %1197 = vst [vmem:[#allocation2 + $0x8] sm:$0xff] %v1195
    // Predicated region
    $region26: #{tpu_custom_call.1} parent=1 // pred_check
      _
    $region27: #{tpu_custom_call.1} parent=1 // pred_check_branch
      %1199 = sbr.rel (0) target = $region29
    $region28: #{tpu_custom_call.1} parent=1 // pred_region
      %1201 = vsyncadd [#allocation3], 0
      %s1202 = sshll.u32 [#allocation2], 4
      %s1203 = int_to_ptr.vmem [resolvable:$true] %s1202
      %s1204 = sshll.u32 %s6, 4
      %s1205 = int_to_ptr.hbm [resolvable:$true] %s1204
      %1210 = dma.vmem_to_hbm [thread:$0]  %s1203, 256, %s1205, [#allocation3], 128, 128, 8
    $region29: #{tpu_custom_call.1} parent=1 // pred_fallthru
      _
    // Predicated region
    $region30: #{tpu_custom_call.1} parent=1 // pred_check
      _
    $region31: #{tpu_custom_call.1} parent=1 // pred_check_branch
      %1212 = sbr.rel (0) target = $region33
    $region32: #{tpu_custom_call.1} parent=1 // pred_region
      %1214 = dma.done [#allocation3], 256
    $region33: #{tpu_custom_call.1} parent=1 // pred_fallthru
      _
    %1215 = vsyncpa [#allocation3], 1

</llo_original>
